<compile_context>
chip_gen: v6e
topology: v6e:2x2x1
jax: 0.10.0
libtpu: 0.0.40
codegen_flags: <defaults>
</compile_context>

<pallas_src>
import functools

import jax
import jax.numpy as jnp
from jax.experimental import pallas as pl
from jax.experimental.pallas import tpu as pltpu


VMEM_BUDGET = 36 << 20  # per-kernel buffer budget; leaves headroom on v7x (64 MiB/TC)


def _round_up(v, m):
    return (v + m - 1) // m * m


def _layernorm_rows(x_ref, g_ref, b_ref, eps, d_valid):
    """LayerNorm over the last (lane-padded) axis; returns f32 rows.

    The feature padding (columns >= d_valid) of x / gamma / beta is zero, so:
      - the mean needs no mask (padded columns contribute 0 to the sum),
      - only the centered values are masked for the variance,
      - gamma/beta zero-padding forces padded output columns to exactly 0.
    """
    x = x_ref[...].astype(jnp.float32)
    d_pad = x.shape[-1]
    inv_d = 1.0 / d_valid
    mean = jnp.sum(x, axis=-1, keepdims=True) * inv_d
    xc = x - mean
    if d_valid != d_pad:
        col = jax.lax.broadcasted_iota(jnp.int32, (1, d_pad), 1)
        xc_v = jnp.where(col < d_valid, xc, 0.0)
    else:
        xc_v = xc
    var = jnp.sum(xc_v * xc_v, axis=-1, keepdims=True) * inv_d
    x_hat = xc * jax.lax.rsqrt(var + eps)
    return x_hat * g_ref[...].astype(jnp.float32) + b_ref[...].astype(jnp.float32)


def _prenorm_linear_kernel_resident(x_ref, g_ref, b_ref, wt_ref, bias_ref, o_ref,
                                    *, eps, d_valid):
    # x_ref:    (TR, Dp)  input rows (Dp = feature dim padded to 128 lanes)
    # g_ref:    (1, Dp)   LayerNorm gamma (zero-padded)
    # b_ref:    (1, Dp)   LayerNorm beta  (zero-padded)
    # wt_ref:   (Dp, Np)  Linear weight, pre-transposed to (in, out), resident
    # bias_ref: (1, Np)   Linear bias (zero-padded)
    # o_ref:    (TR, Np)  output tile
    y = _layernorm_rows(x_ref, g_ref, b_ref, eps, d_valid).astype(wt_ref.dtype)
    out = jax.lax.dot_general(
        y, wt_ref[...],
        dimension_numbers=(((1,), (0,)), ((), ())),
        preferred_element_type=jnp.float32)
    out = out + bias_ref[...].astype(jnp.float32)
    o_ref[...] = out.astype(o_ref.dtype)


def _prenorm_linear_kernel_tiled(x_ref, g_ref, b_ref, wt_ref, bias_ref, o_ref, y_ref,
                                 *, eps, d_valid):
    # Column-tiled variant for weights too large to keep resident in VMEM.
    # y_ref (VMEM scratch) caches the normalized rows across output-column
    # tiles; this relies on the column axis being iterated 0..N-1 sequentially
    # for each row tile, i.e. it MUST stay "arbitrary" (never "parallel").
    j = pl.program_id(1)

    @pl.when(j == 0)
    def _compute_layernorm():
        y_ref[...] = _layernorm_rows(x_ref, g_ref, b_ref, eps, d_valid).astype(y_ref.dtype)

    out = jax.lax.dot_general(
        y_ref[...], wt_ref[...],
        dimension_numbers=(((1,), (0,)), ((), ())),
        preferred_element_type=jnp.float32)
    out = out + bias_ref[...].astype(jnp.float32)
    o_ref[...] = out.astype(o_ref.dtype)


def _prepare_params(gamma, beta, w, bias, Dp, Np):
    """One-time parameter prep (pad + transpose). In production this is hoisted
    to weight-preparation time, not repeated per forward call."""
    D = gamma.shape[0]
    g2 = gamma.reshape(1, D)
    b2 = beta.reshape(1, D)
    bs2 = bias.reshape(1, D)
    if Dp != D:
        g2 = jnp.pad(g2, ((0, 0), (0, Dp - D)))
        b2 = jnp.pad(b2, ((0, 0), (0, Dp - D)))
    if Np != D:
        bs2 = jnp.pad(bs2, ((0, 0), (0, Np - D)))
    # PyTorch Linear weight is (out, in); pre-transpose once to (in, out) so the
    # kernel does a plain NN contraction (no per-step weight-tile transpose).
    wt = w.T
    if wt.shape != (Dp, Np):
        wt = jnp.pad(wt, ((0, Dp - wt.shape[0]), (0, Np - wt.shape[1])))
    return g2, b2, wt, bs2


def prenorm_linear(x, gamma, beta, w, bias, *, eps=1e-5, row_tile=256, col_tile=256):
    """PreNorm with fn = Linear(dim, dim).  x: [B, S, D] -> [B, S, D].

    `w` is the PyTorch Linear weight with shape (out, in) = (D, D).
    """
    B, S, D = x.shape
    R = B * S
    x2 = x.reshape(R, D)

    x_isz = jnp.dtype(x.dtype).itemsize
    w_isz = jnp.dtype(w.dtype).itemsize
    sublane = max(8, 32 // x_isz)  # 8 for f32, 16 for bf16

    # Lane-dense feature dim: pad D up to a multiple of 128 (only wrapper copy
    # of x that remains, and only when D % 128 != 0).
    Dp = _round_up(D, 128)

    # Resident-weight path whenever the padded weight fits comfortably in VMEM
    # (true for typical transformer dims, even on v7x's 64 MiB/TC).
    resident = (Dp * Dp * w_isz) <= (8 << 20)

    if resident:
        Np = Dp
        tile_n = Np
        row_target = row_tile
    else:
        tile_n = max(256, _round_up(col_tile, 256))  # 256-multiple N tiles (v6e/v7x MXU)
        Np = _round_up(D, tile_n)
        row_target = max(row_tile, 512)              # cut weight re-streaming

    # Row tiling: large tiles, no row padding (ragged last block handled by Pallas).
    tile_r = min(_round_up(row_target, sublane), _round_up(R, sublane))
    # v7x megacore: make sure the "parallel" row axis has >= 2 tiles for 2 TCs.
    if R > sublane and pl.cdiv(R, tile_r) < 2:
        tile_r = max(sublane, _round_up(pl.cdiv(R, 2), sublane))

    def vmem_needed(tr):
        if resident:
            return (2 * tr * Dp * x_isz            # x tile (double buffered)
                    + 2 * tr * Np * x_isz          # out tile (double buffered)
                    + 2 * Dp * Np * w_isz          # resident weight (conservative 2x)
                    + 2 * (2 * Dp + Np) * 4        # gamma / beta / bias
                    + 3 * tr * Dp * 4)             # f32 LN intermediates
        return (2 * tr * Dp * x_isz                # x tile
                + 2 * tr * tile_n * x_isz          # out tile
                + 2 * Dp * tile_n * w_isz          # weight tile (double buffered)
                + tr * Dp * w_isz                  # cached-LN scratch
                + 2 * (2 * Dp + tile_n) * 4        # gamma / beta / bias
                + 3 * tr * Dp * 4)                 # f32 LN intermediates

    while vmem_needed(tile_r) > VMEM_BUDGET and tile_r > sublane:
        tile_r = max(sublane, _round_up(tile_r // 2, sublane))

    num_row_tiles = pl.cdiv(R, tile_r)
    vmem_limit = int(min(max(vmem_needed(tile_r) * 3 // 2, 16 << 20), 40 << 20))

    if Dp != D:
        x2 = jnp.pad(x2, ((0, 0), (0, Dp - D)))

    # One-time param prep (pad + transpose); hoist out of the hot path in real use.
    g2, b2, wt, bias2 = _prepare_params(gamma, beta, w, bias, Dp, Np)

    w_stream = Dp * Np * w_isz if resident else num_row_tiles * Dp * Np * w_isz
    cost = pl.CostEstimate(
        flops=int(2 * R * Dp * Np + 10 * R * Dp),
        transcendentals=int(R),
        bytes_accessed=int(R * Dp * x_isz + R * Np * x_isz + w_stream
                           + (2 * Dp + Np) * 4))

    if resident:
        kernel = functools.partial(_prenorm_linear_kernel_resident, eps=eps, d_valid=D)
        grid_spec = pltpu.PrefetchScalarGridSpec(
            num_scalar_prefetch=0,
            grid=(num_row_tiles,),
            in_specs=[
                pl.BlockSpec((tile_r, Dp), lambda i: (i, 0)),   # x rows
                pl.BlockSpec((1, Dp), lambda i: (0, 0)),        # gamma (invariant)
                pl.BlockSpec((1, Dp), lambda i: (0, 0)),        # beta  (invariant)
                pl.BlockSpec((Dp, Np), lambda i: (0, 0)),       # W^T resident (fetched once)
                pl.BlockSpec((1, Np), lambda i: (0, 0)),        # bias  (invariant)
            ],
            out_specs=pl.BlockSpec((tile_r, Np), lambda i: (i, 0)),
        )
        dim_sem = ("parallel",)
    else:
        kernel = functools.partial(_prenorm_linear_kernel_tiled, eps=eps, d_valid=D)
        grid_spec = pltpu.PrefetchScalarGridSpec(
            num_scalar_prefetch=0,
            grid=(num_row_tiles, Np // tile_n),
            in_specs=[
                pl.BlockSpec((tile_r, Dp), lambda i, j: (i, 0)),     # x rows
                pl.BlockSpec((1, Dp), lambda i, j: (0, 0)),          # gamma
                pl.BlockSpec((1, Dp), lambda i, j: (0, 0)),          # beta
                pl.BlockSpec((Dp, tile_n), lambda i, j: (0, j)),     # W^T column tile
                pl.BlockSpec((1, tile_n), lambda i, j: (0, j)),      # bias tile
            ],
            out_specs=pl.BlockSpec((tile_r, tile_n), lambda i, j: (i, j)),
            scratch_shapes=[pltpu.VMEM((tile_r, Dp), w.dtype)],      # cached LN rows
        )
        # Axis 1 must stay "arbitrary": the j==0 LN cache depends on sequential
        # 0..N-1 iteration of the column axis for each row tile.
        dim_sem = ("parallel", "arbitrary")

    out2 = pl.pallas_call(
        kernel,
        out_shape=jax.ShapeDtypeStruct((R, Np), x.dtype),
        grid_spec=grid_spec,
        compiler_params=pltpu.CompilerParams(
            dimension_semantics=dim_sem,
            vmem_limit_bytes=vmem_limit),
        cost_estimate=cost,
    )(x2, g2, b2, wt, bias2)

    if Np != D:
        out2 = out2[:, :D]
    return out2.reshape(B, S, D)


def _reference(x, gamma, beta, w, bias, eps=1e-5):
    xf = x.astype(jnp.float32)
    mean = jnp.mean(xf, axis=-1, keepdims=True)
    var = jnp.mean((xf - mean) ** 2, axis=-1, keepdims=True)
    y = (xf - mean) * jax.lax.rsqrt(var + eps) * gamma + beta
    y = y.astype(w.dtype)  # same MXU feed dtype as the kernel
    out = jax.lax.dot_general(y, w, (((y.ndim - 1,), (1,)), ((), ())),
                              preferred_element_type=jnp.float32)
    return (out + bias).astype(x.dtype)


if __name__ == "__main__":
    B, S, D = 2, 8, 32  # batch, seq, dim (LayerNorm over dim)

    key = jax.random.PRNGKey(0)
    kx, kw, kb = jax.random.split(key, 3)

    x = jax.random.normal(kx, (B, S, D), dtype=jnp.float32)

    # nn.LayerNorm(dim) default init: gamma=1, beta=0
    gamma = jnp.ones((D,), dtype=jnp.float32)
    beta = jnp.zeros((D,), dtype=jnp.float32)

    # fn = nn.Linear(dim, dim): weight (out, in), bias (out,).
    # Weight stored in bf16 to exercise the native bf16-MXU / f32-accumulate path.
    w = (jax.random.normal(kw, (D, D), dtype=jnp.float32) / jnp.sqrt(D)).astype(jnp.bfloat16)
    bias = jax.random.normal(kb, (D,), dtype=jnp.float32) * 0.01

    out = prenorm_linear(x, gamma, beta, w, bias)
    out = jax.block_until_ready(out)

    ref = _reference(x, gamma, beta, w, bias)
    assert out.shape == (B, S, D)
    max_err = jnp.max(jnp.abs(out.astype(jnp.float32) - ref.astype(jnp.float32)))
    assert jnp.allclose(out, ref, atol=1e-2, rtol=1e-2), f"mismatch vs reference (max err {max_err})"

    # TODO(synk): `fn` in PreNorm is an arbitrary module; only the Linear(dim, dim)
    # instantiation is fused here.

    print("KERNEL_OK")
</pallas_src>

<mosaic_0001>
module attributes {stable_mosaic.version = 11 : i64} {
  func.func @_prenorm_linear_kernel_resident(%arg0: i32, %arg1: memref<8x128xf32, #tpu.memory_space<vmem>>, %arg2: memref<1x128xf32, #tpu.memory_space<vmem>>, %arg3: memref<1x128xf32, #tpu.memory_space<vmem>>, %arg4: memref<128x128xbf16, #tpu.memory_space<vmem>>, %arg5: memref<1x128xf32, #tpu.memory_space<vmem>>, %arg6: memref<8x128xf32, #tpu.memory_space<vmem>>) attributes {dimension_semantics = [#tpu.dimension_semantics<parallel>], iteration_bounds = array<i64: 2>, scalar_prefetch = 0 : i64, scratch_operands = 0 : i64, tpu.core_type = #tpu.core_type<tc>, window_params = [{transform_indices = @transform_0, window_bounds = array<i64: 8, 128>}, {pipeline_mode = #tpu.pipeline_mode<synchronous>, transform_indices = @transform_1, window_bounds = array<i64: 1, 128>}, {pipeline_mode = #tpu.pipeline_mode<synchronous>, transform_indices = @transform_2, window_bounds = array<i64: 1, 128>}, {pipeline_mode = #tpu.pipeline_mode<synchronous>, transform_indices = @transform_3, window_bounds = array<i64: 128, 128>}, {pipeline_mode = #tpu.pipeline_mode<synchronous>, transform_indices = @transform_4, window_bounds = array<i64: 1, 128>}, {transform_indices = @transform_5, window_bounds = array<i64: 8, 128>}]} {
    %c0 = arith.constant 0 : index
    %c0_0 = arith.constant 0 : index
    %0 = vector.load %arg1[%c0, %c0_0] : memref<8x128xf32, #tpu.memory_space<vmem>>, vector<8x128xf32>
    %cst = arith.constant dense<0.000000e+00> : vector<8xf32>
    %1 = vector.multi_reduction <add>, %0, %cst [1] : vector<8x128xf32> to vector<8xf32>
    %2 = vector.shape_cast %1 : vector<8xf32> to vector<8x1xf32>
    %cst_1 = arith.constant 3.125000e-02 : f32
    %3 = vector.broadcast %cst_1 : f32 to vector<8x1xf32>
    %4 = arith.mulf %2, %3 : vector<8x1xf32>
    %5 = vector.broadcast %4 : vector<8x1xf32> to vector<8x128xf32>
    %6 = arith.subf %0, %5 : vector<8x128xf32>
    %7 = tpu.iota {dimensions = array<i32: 1>} : vector<1x128xi32>
    %c32_i32 = arith.constant 32 : i32
    %8 = vector.broadcast %c32_i32 : i32 to vector<1x128xi32>
    %9 = arith.cmpi slt, %7, %8 : vector<1x128xi32>
    %cst_2 = arith.constant 0.000000e+00 : f32
    %10 = vector.shape_cast %9 : vector<1x128xi1> to vector<1x128xi1>
    %11 = vector.broadcast %10 : vector<1x128xi1> to vector<8x128xi1>
    %12 = vector.broadcast %cst_2 : f32 to vector<8x128xf32>
    %13 = arith.select %11, %6, %12 : vector<8x128xi1>, vector<8x128xf32>
    %14 = arith.mulf %13, %13 : vector<8x128xf32>
    %cst_3 = arith.constant dense<0.000000e+00> : vector<8xf32>
    %15 = vector.multi_reduction <add>, %14, %cst_3 [1] : vector<8x128xf32> to vector<8xf32>
    %16 = vector.shape_cast %15 : vector<8xf32> to vector<8x1xf32>
    %cst_4 = arith.constant 3.125000e-02 : f32
    %17 = vector.broadcast %cst_4 : f32 to vector<8x1xf32>
    %18 = arith.mulf %16, %17 : vector<8x1xf32>
    %cst_5 = arith.constant 9.99999974E-6 : f32
    %19 = vector.broadcast %cst_5 : f32 to vector<8x1xf32>
    %20 = arith.addf %18, %19 : vector<8x1xf32>
    %21 = math.rsqrt %20 : vector<8x1xf32>
    %22 = vector.broadcast %21 : vector<8x1xf32> to vector<8x128xf32>
    %23 = arith.mulf %6, %22 : vector<8x128xf32>
    %c0_6 = arith.constant 0 : index
    %c0_7 = arith.constant 0 : index
    %24 = vector.load %arg2[%c0_6, %c0_7] : memref<1x128xf32, #tpu.memory_space<vmem>>, vector<1x128xf32>
    %25 = vector.broadcast %24 : vector<1x128xf32> to vector<8x128xf32>
    %26 = arith.mulf %23, %25 : vector<8x128xf32>
    %c0_8 = arith.constant 0 : index
    %c0_9 = arith.constant 0 : index
    %27 = vector.load %arg3[%c0_8, %c0_9] : memref<1x128xf32, #tpu.memory_space<vmem>>, vector<1x128xf32>
    %28 = vector.broadcast %27 : vector<1x128xf32> to vector<8x128xf32>
    %29 = arith.addf %26, %28 : vector<8x128xf32>
    %30 = arith.truncf %29 : vector<8x128xf32> to vector<8x128xbf16>
    %c0_10 = arith.constant 0 : index
    %c0_11 = arith.constant 0 : index
    %31 = vector.load %arg4[%c0_10, %c0_11] : memref<128x128xbf16, #tpu.memory_space<vmem>>, vector<128x128xbf16>
    %cst_12 = arith.constant dense<0.000000e+00> : vector<8x128xf32>
    %32 = tpu.matmul %30, %31, %cst_12 {dimension_numbers = #tpu.dot_dimension_numbers<[1], [0], [0], [1], [0, 0, 1, 1], [], []>} : vector<8x128xbf16>, vector<128x128xbf16>, vector<8x128xf32> -> vector<8x128xf32>
    %c0_13 = arith.constant 0 : index
    %c0_14 = arith.constant 0 : index
    %33 = vector.load %arg5[%c0_13, %c0_14] : memref<1x128xf32, #tpu.memory_space<vmem>>, vector<1x128xf32>
    %34 = vector.broadcast %33 : vector<1x128xf32> to vector<8x128xf32>
    %35 = arith.addf %32, %34 : vector<8x128xf32>
    %c0_15 = arith.constant 0 : index
    %c0_16 = arith.constant 0 : index
    %36 = vector.load %arg6[%c0_15, %c0_16] : memref<8x128xf32, #tpu.memory_space<vmem>>, vector<8x128xf32>
    tpu.vector_store %arg6[%c0_15, %c0_16], %35 {strides = array<i32>} : memref<8x128xf32, #tpu.memory_space<vmem>>, vector<8x128xf32>,
    return
  }
  func.func @transform_0(%arg0: i32) -> (i32, i32) {
    %c0_i32 = arith.constant 0 : i32
    %c0_i32_0 = arith.constant 0 : i32
    return %arg0, %c0_i32 : i32, i32
  }
  func.func @transform_1(%arg0: i32) -> (i32, i32) {
    %c0_i32 = arith.constant 0 : i32
    %c0_i32_0 = arith.constant 0 : i32
    %c0_i32_1 = arith.constant 0 : i32
    return %c0_i32, %c0_i32_0 : i32, i32
  }
  func.func @transform_2(%arg0: i32) -> (i32, i32) {
    %c0_i32 = arith.constant 0 : i32
    %c0_i32_0 = arith.constant 0 : i32
    %c0_i32_1 = arith.constant 0 : i32
    return %c0_i32, %c0_i32_0 : i32, i32
  }
  func.func @transform_3(%arg0: i32) -> (i32, i32) {
    %c0_i32 = arith.constant 0 : i32
    %c0_i32_0 = arith.constant 0 : i32
    %c0_i32_1 = arith.constant 0 : i32
    return %c0_i32, %c0_i32_0 : i32, i32
  }
  func.func @transform_4(%arg0: i32) -> (i32, i32) {
    %c0_i32 = arith.constant 0 : i32
    %c0_i32_0 = arith.constant 0 : i32
    %c0_i32_1 = arith.constant 0 : i32
    return %c0_i32, %c0_i32_0 : i32, i32
  }
  func.func @transform_5(%arg0: i32) -> (i32, i32) {
    %c0_i32 = arith.constant 0 : i32
    %c0_i32_0 = arith.constant 0 : i32
    return %arg0, %c0_i32 : i32, i32
  }
}

</mosaic_0001>

<llo_original>
// kernel: tpu_custom_call.1
$region0: #{tpu_custom_call.1}
  #allocation0 [shape = 'u32[]', space=smem, size = 0x4, offset = 0x4, fixed_abs, tag = 'smem constant byte address 0x4 - core index']
  #allocation1 [shape = 'u32[144,128]{1,0:T(1,128)}', space=vmem, size = 0x12000, scoped, tag = 'internal scratch']
  %s0 = inlined_call_operand.hbm [shape: f32[16,128], index: 0, kind: input, shape index: {}]
  %s1 = inlined_call_operand.vmem [shape: f32[1,128], index: 1, kind: input, shape index: {}]
  %s2 = inlined_call_operand.vmem [shape: f32[1,128], index: 2, kind: input, shape index: {}]
  %s3 = inlined_call_operand.hbm [shape: bf16[128,128], index: 3, kind: input, shape index: {}]
  %s4 = inlined_call_operand.vmem [shape: f32[1,128], index: 4, kind: input, shape index: {}]
  %s5 = inlined_call_operand.hbm [shape: f32[16,128], index: 5, kind: output, shape index: {}]
  %s6 = sld [smem:[#allocation0]]
  $region61: #{tpu_custom_call.1} parent=0
    _
  %s8 = ssub.s32 1, %s6
  %s9 = scalar_select 0, %s8, %s6
  $region1: #{tpu_custom_call.1} parent=0
    #allocation2 [shape = 'u8[8192]{0}', space=vmem, size = 0x2000, scoped, tag = 'input window, operand 0']
    #allocation3 [shape = 's32[2]{0}', space=sflag, size = 0x8, scoped, tag = 'scoped memory for tpu_custom_call.1']
    #allocation4 [shape = 's32[2]{0}', space=sflag, size = 0x8, scoped, tag = 'scoped memory for tpu_custom_call.1']
    #allocation5 [shape = 'u8[32768]{0}', space=vmem, size = 0x8000, scoped, tag = 'input window, operand 3, single buffered']
    #allocation6 [shape = 's32[1]{0}', space=sflag, size = 0x4, scoped, tag = 'scoped memory for tpu_custom_call.1']
    #allocation7 [shape = 'u8[8192]{0}', space=vmem, size = 0x2000, scoped, tag = 'output window, operand 0']
    %10 = vsyncpa [#allocation3], 0
    %s11 = scalar_lea.sflag [#allocation3], 1
    %12 = vsyncpa %s11, 0
    %13 = vsyncpa [#allocation6], 0
    %14 = vsyncpa [#allocation4], 0
    %s15 = scalar_lea.sflag [#allocation4], 1
    %16 = vsyncpa %s15, 0
    loop: start=0, step=1, limit=4
    $region2: #{tpu_custom_call.1} parent=1 // loop_pre_header
      _
    $region3: #{tpu_custom_call.1} parent=1 // loop_header
      %s18 = sphi 0, %s22
      %p19 = scmp.ge.s32.totalorder %s18, 4
      %s28 = sphi 0, %s30
      %s31 = sphi 0, %s28
      %s32 = sphi 0, %s31
      %s48 = sphi 0, %s32
      %s52 = sphi 0, %s52
      %s54 = sphi 0, %s52
      %s55 = sphi 0, %s54
      %s69 = sphi 0, %s55
      %s73 = sphi 0, %s73
      %s75 = sphi 0, %s73
      %s76 = sphi 0, %s75
      %s90 = sphi 0, %s76
      %s94 = sphi 0, %s94
      %s96 = sphi 0, %s94
      %s97 = sphi 0, %s96
      %s111 = sphi 0, %s97
      %s115 = sphi 0, %s115
      %s117 = sphi 0, %s115
      %s118 = sphi 0, %s117
      %s132 = sphi 0, %s118
      %s138 = sphi 0, %s140
      %s141 = sphi 0, %s138
      %s142 = sphi 0, %s141
      %s158 = sphi 0, %s142
    $region4: #{tpu_custom_call.1} parent=1 // loop_header_branch
      %21 = sbr.rel (%p19) target = $region8
    $region5: #{tpu_custom_call.1} parent=1 // loop_body
      %s23 = ssub.s32 %s18, 1
      %s24 = ssub.s32 %s18, 2
      %s25 = sadd.s32 %s18, 1
      %s26 = ssub.s32 %s18, %s25
      %p27 = scmp.eq.s32.totalorder %s26, 0
      %s29 = sadd.s32 %s28, 1
      %s30 = scalar_select %p27, %s28, %s29
      %p33 = pneg %p27
      %p34 = scmp.eq.s32.totalorder %s18, 1
      %p35 = por %p33, %p34
      %p36 = scmp.ne.s32.totalorder %s28, %s31
      %p37 = scmp.eq.s32.totalorder %s18, 0
      %p38 = por %p36, %p37
      %p39 = scmp.ne.s32.totalorder %s28, %s31
      %p40 = scmp.eq.s32.totalorder %s23, 1
      %p41 = por %p39, %p40
      %p42 = scmp.ne.s32.totalorder %s31, %s32
      %p43 = scmp.eq.s32.totalorder %s23, 0
      %p44 = por %p42, %p43
      %p45 = scmp.ne.s32.totalorder %s31, %s32
      %p46 = scmp.eq.s32.totalorder %s24, 1
      %p47 = por %p45, %p46
      %p49 = scmp.ne.s32.totalorder %s32, %s48
      %p50 = scmp.eq.s32.totalorder %s24, 0
      %p51 = por %p49, %p50
      %s53 = sadd.s32 %s52, 1
      %p56 = scmp.eq.s32.totalorder %s18, 1
      %p57 = scmp.ne.s32.totalorder %s52, %s54
      %p58 = scmp.eq.s32.totalorder %s18, 0
      %p59 = por %p57, %p58
      %p60 = scmp.ne.s32.totalorder %s52, %s54
      %p61 = scmp.eq.s32.totalorder %s23, 1
      %p62 = por %p60, %p61
      %p63 = scmp.ne.s32.totalorder %s54, %s55
      %p64 = scmp.eq.s32.totalorder %s23, 0
      %p65 = por %p63, %p64
      %p66 = scmp.ne.s32.totalorder %s54, %s55
      %p67 = scmp.eq.s32.totalorder %s24, 1
      %p68 = por %p66, %p67
      %p70 = scmp.ne.s32.totalorder %s55, %s69
      %p71 = scmp.eq.s32.totalorder %s24, 0
      %p72 = por %p70, %p71
      %s74 = sadd.s32 %s73, 1
      %p77 = scmp.eq.s32.totalorder %s18, 1
      %p78 = scmp.ne.s32.totalorder %s73, %s75
      %p79 = scmp.eq.s32.totalorder %s18, 0
      %p80 = por %p78, %p79
      %p81 = scmp.ne.s32.totalorder %s73, %s75
      %p82 = scmp.eq.s32.totalorder %s23, 1
      %p83 = por %p81, %p82
      %p84 = scmp.ne.s32.totalorder %s75, %s76
      %p85 = scmp.eq.s32.totalorder %s23, 0
      %p86 = por %p84, %p85
      %p87 = scmp.ne.s32.totalorder %s75, %s76
      %p88 = scmp.eq.s32.totalorder %s24, 1
      %p89 = por %p87, %p88
      %p91 = scmp.ne.s32.totalorder %s76, %s90
      %p92 = scmp.eq.s32.totalorder %s24, 0
      %p93 = por %p91, %p92
      %s95 = sadd.s32 %s94, 1
      %p98 = scmp.eq.s32.totalorder %s18, 1
      %p99 = scmp.ne.s32.totalorder %s94, %s96
      %p100 = scmp.eq.s32.totalorder %s18, 0
      %p101 = por %p99, %p100
      %p102 = scmp.ne.s32.totalorder %s94, %s96
      %p103 = scmp.eq.s32.totalorder %s23, 1
      %p104 = por %p102, %p103
      %p105 = scmp.ne.s32.totalorder %s96, %s97
      %p106 = scmp.eq.s32.totalorder %s23, 0
      %p107 = por %p105, %p106
      %p108 = scmp.ne.s32.totalorder %s96, %s97
      %p109 = scmp.eq.s32.totalorder %s24, 1
      %p110 = por %p108, %p109
      %p112 = scmp.ne.s32.totalorder %s97, %s111
      %p113 = scmp.eq.s32.totalorder %s24, 0
      %p114 = por %p112, %p113
      %s116 = sadd.s32 %s115, 1
      %p119 = scmp.eq.s32.totalorder %s18, 1
      %p120 = scmp.ne.s32.totalorder %s115, %s117
      %p121 = scmp.eq.s32.totalorder %s18, 0
      %p122 = por %p120, %p121
      %p123 = scmp.ne.s32.totalorder %s115, %s117
      %p124 = scmp.eq.s32.totalorder %s23, 1
      %p125 = por %p123, %p124
      %p126 = scmp.ne.s32.totalorder %s117, %s118
      %p127 = scmp.eq.s32.totalorder %s23, 0
      %p128 = por %p126, %p127
      %p129 = scmp.ne.s32.totalorder %s117, %s118
      %p130 = scmp.eq.s32.totalorder %s24, 1
      %p131 = por %p129, %p130
      %p133 = scmp.ne.s32.totalorder %s118, %s132
      %p134 = scmp.eq.s32.totalorder %s24, 0
      %p135 = por %p133, %p134
      %s136 = ssub.s32 %s18, %s25
      %p137 = scmp.eq.s32.totalorder %s136, 0
      %s139 = sadd.s32 %s138, 1
      %s140 = scalar_select %p137, %s138, %s139
      %p143 = pneg %p137
      %p144 = scmp.eq.s32.totalorder %s18, 1
      %p145 = por %p143, %p144
      %p146 = scmp.ne.s32.totalorder %s138, %s141
      %p147 = scmp.eq.s32.totalorder %s18, 0
      %p148 = por %p146, %p147
      %p149 = scmp.ne.s32.totalorder %s138, %s141
      %p150 = scmp.eq.s32.totalorder %s23, 1
      %p151 = por %p149, %p150
      %p152 = scmp.ne.s32.totalorder %s141, %s142
      %p153 = scmp.eq.s32.totalorder %s23, 0
      %p154 = por %p152, %p153
      %p155 = scmp.ne.s32.totalorder %s141, %s142
      %p156 = scmp.eq.s32.totalorder %s24, 1
      %p157 = por %p155, %p156
      %p159 = scmp.ne.s32.totalorder %s142, %s158
      %p160 = scmp.eq.s32.totalorder %s24, 0
      %p161 = por %p159, %p160
      %p162 = scmp.le.s32.totalorder 1, %s18
      %p163 = scmp.lt.s32.totalorder %s18, 3
      %p164 = pnand %p162, %p163
      %p165 = pneg %p164
      // Predicated region
      $region9: #{tpu_custom_call.1} parent=5 // pred_check
        _
      $region10: #{tpu_custom_call.1} parent=5 // pred_check_branch
        %167 = sbr.rel (%p164) target = $region12
      $region11: #{tpu_custom_call.1} parent=5 // pred_region
        %s168 = ssub.s32 %s18, 1
        // Predicated region
        $region13: #{tpu_custom_call.1} parent=11 // pred_check
          %p169 = pneg %p65
        $region14: #{tpu_custom_call.1} parent=11 // pred_check_branch
          %171 = sbr.rel (%p169) target = $region16
        $region15: #{tpu_custom_call.1} parent=11 // pred_region
          _
        $region16: #{tpu_custom_call.1} parent=11 // pred_fallthru
          _
        // Predicated region
        $region17: #{tpu_custom_call.1} parent=11 // pred_check
          %p172 = pneg %p86
        $region18: #{tpu_custom_call.1} parent=11 // pred_check_branch
          %174 = sbr.rel (%p172) target = $region20
        $region19: #{tpu_custom_call.1} parent=11 // pred_region
          _
        $region20: #{tpu_custom_call.1} parent=11 // pred_fallthru
          _
        // Predicated region
        $region21: #{tpu_custom_call.1} parent=11 // pred_check
          %p175 = pneg %p107
        $region22: #{tpu_custom_call.1} parent=11 // pred_check_branch
          %177 = sbr.rel (%p175) target = $region24
        $region23: #{tpu_custom_call.1} parent=11 // pred_region
          %s179 = ssub.s32 1024, 1024
          %180 = vsyncadd [#allocation6], %s179
          %s181 = sshll.u32 [#allocation5], 4
          %s182 = int_to_ptr.vmem [resolvable:$true] %s181
          %187 = dma.hbm_to_vmem [thread:$0]  %s3, 1024, %s182, [#allocation6], 64, 64, 4
        $region24: #{tpu_custom_call.1} parent=11 // pred_fallthru
          _
        // Predicated region
        $region25: #{tpu_custom_call.1} parent=11 // pred_check
          %p188 = pneg %p128
        $region26: #{tpu_custom_call.1} parent=11 // pred_check_branch
          %190 = sbr.rel (%p188) target = $region28
        $region27: #{tpu_custom_call.1} parent=11 // pred_region
          _
        $region28: #{tpu_custom_call.1} parent=11 // pred_fallthru
          _
      $region12: #{tpu_custom_call.1} parent=5 // pred_fallthru
        _
      %p191 = scmp.lt.s32.totalorder %s18, 2
      // Predicated region
      $region29: #{tpu_custom_call.1} parent=5 // pred_check
        %p192 = pneg %p191
      $region30: #{tpu_custom_call.1} parent=5 // pred_check_branch
        %194 = sbr.rel (%p192) target = $region32
      $region31: #{tpu_custom_call.1} parent=5 // pred_region
        // Predicated region
        $region33: #{tpu_custom_call.1} parent=31 // pred_check
          %p195 = pneg %p38
        $region34: #{tpu_custom_call.1} parent=31 // pred_check_branch
          %197 = sbr.rel (%p195) target = $region36
        $region35: #{tpu_custom_call.1} parent=31 // pred_region
          %s198 = sand.u32 %s28, 1
          %s199 = scalar_lea.sflag [#allocation3], %s198
          %s200 = sand.u32 %s28, 1
          %s201 = smul.addr %s200, 8
          %s202 = scalar_lea.vmem [#allocation2], %s201
          %s204 = ssub.s32 128, 128
          %205 = vsyncadd %s199, %s204
          %s206 = smul.addr %s18, 128
          %s207 = scalar_lea.hbm %s0, %s206
          %s209 = sshll.u32 %s202, 4
          %s210 = int_to_ptr.vmem [resolvable:$true] %s209
          %212 = dma.hbm_to_vmem [thread:$0]  %s207, 128, %s210, %s199
        $region36: #{tpu_custom_call.1} parent=31 // pred_fallthru
          _
      $region32: #{tpu_custom_call.1} parent=5 // pred_fallthru
        _
      %p213 = scmp.le.s32.totalorder 1, %s18
      %p214 = scmp.lt.s32.totalorder %s18, 3
      %p215 = pnand %p213, %p214
      %p216 = pneg %p215
      // Predicated region
      $region37: #{tpu_custom_call.1} parent=5 // pred_check
        _
      $region38: #{tpu_custom_call.1} parent=5 // pred_check_branch
        %218 = sbr.rel (%p215) target = $region40
      $region39: #{tpu_custom_call.1} parent=5 // pred_region
        %s219 = ssub.s32 %s18, 1
        %s220 = sand.u32 %s31, 1
        %s221 = scalar_lea.sflag [#allocation3], %s220
        %s222 = sand.u32 %s31, 1
        %s223 = smul.addr %s222, 8
        %s224 = scalar_lea.vmem [#allocation2], %s223
        // Predicated region
        $region41: #{tpu_custom_call.1} parent=39 // pred_check
          %p225 = pneg %p44
        $region42: #{tpu_custom_call.1} parent=39 // pred_check_branch
          %227 = sbr.rel (%p225) target = $region44
        $region43: #{tpu_custom_call.1} parent=39 // pred_region
          %228 = dma.done %s221, 128
        $region44: #{tpu_custom_call.1} parent=39 // pred_fallthru
          _
        // Predicated region
        $region45: #{tpu_custom_call.1} parent=39 // pred_check
          %p229 = pneg %p107
        $region46: #{tpu_custom_call.1} parent=39 // pred_check_branch
          %231 = sbr.rel (%p229) target = $region48
        $region47: #{tpu_custom_call.1} parent=39 // pred_region
          %232 = dma.done [#allocation6], 1024
        $region48: #{tpu_custom_call.1} parent=39 // pred_fallthru
          _
        %s233 = sand.u32 %s31, 1
        %s234 = scalar_lea.sflag [#allocation3], %s233
        %s235 = sand.u32 %s31, 1
        %s236 = smul.addr %s235, 8
        %s237 = scalar_lea.vmem [#allocation2], %s236
        %p238 = pneg %p44
        %p239 = pneg %p41
        %p240 = pneg %p65
        %p241 = pneg %p62
        %p242 = pneg %p86
        %p243 = pneg %p83
        %p244 = pneg %p107
        %p245 = pneg %p104
        %p246 = pneg %p128
        %p247 = pneg %p125
        %p248 = pneg %p154
        %p249 = pneg %p151
        %s250 = sand.u32 %s141, 1
        %s251 = scalar_lea.sflag [#allocation4], %s250
        %s252 = sand.u32 %s141, 1
        %s253 = smul.addr %s252, 8
        %s254 = scalar_lea.vmem [#allocation7], %s253
        %v256 = vld [vmem:[%s224] sm:$0xff]
        %257 = vadd.xlane.f32.xlu0 %v256
        %v258 = vpop.xlane.xlu0 %257
        %v259 = vmul.f32 %v258, 0.03125
        %v260 = vsub.f32 %v256, %v259
        %v261 = vlaneseq
        %v262 = vand.u32 %v261, 127
        %vm263 = vcmp.lt.s32.totalorder %v262, 32
        %v264 = vsel %vm263, 1, 0
        %vm265 = vcmp.eq.s32.totalorder %v264, 1
        %v266 = vsel %vm265, %v260, 0.0
        %v267 = vmul.f32 %v266, %v266
        %268 = vadd.xlane.f32.xlu0 %v267
        %v269 = vpop.xlane.xlu0 %268
        %v270 = vmul.f32 %v269, 0.03125
        %v271 = vadd.f32 %v270, 1e-05
        %v272 = vrsqrt.pop %v271
        %v273 = vmul.f32 %v260, %v272
        %v274 = vld [vmem:[%s1] sm:$0x1]
        %v276 = vlaneseq
        %v277 = vshrl.u32 %v276, 7
        %v278 = vsub.s32 0, %v277
        %v279 = vrot.slane %v274, %v278
        %v281 = vmul.f32 %v273, %v279
        %v282 = vld [vmem:[%s2] sm:$0x1]
        %v284 = vlaneseq
        %v285 = vshrl.u32 %v284, 7
        %v286 = vsub.s32 0, %v285
        %v287 = vrot.slane %v282, %v286
        %v289 = vadd.f32 %v281, %v287
        %v290 = vpack.c.bf16 %v289, %v289
        %v291 = vld [vmem:[#allocation5] sm:$0xf]
        %v292 = vld [vmem:[#allocation5 + $0x4] sm:$0xf]
        %v293 = vld [vmem:[#allocation5 + $0x8] sm:$0xf]
        %v294 = vld [vmem:[#allocation5 + $0xc] sm:$0xf]
        %v295 = vld [vmem:[#allocation5 + $0x10] sm:$0xf]
        %v296 = vld [vmem:[#allocation5 + $0x14] sm:$0xf]
        %v297 = vld [vmem:[#allocation5 + $0x18] sm:$0xf]
        %v298 = vld [vmem:[#allocation5 + $0x1c] sm:$0xf]
        %v299 = vld [vmem:[#allocation5 + $0x20] sm:$0xf]
        %v300 = vld [vmem:[#allocation5 + $0x24] sm:$0xf]
        %v301 = vld [vmem:[#allocation5 + $0x28] sm:$0xf]
        %v302 = vld [vmem:[#allocation5 + $0x2c] sm:$0xf]
        %v303 = vld [vmem:[#allocation5 + $0x30] sm:$0xf]
        %v304 = vld [vmem:[#allocation5 + $0x34] sm:$0xf]
        %v305 = vld [vmem:[#allocation5 + $0x38] sm:$0xf]
        %v306 = vld [vmem:[#allocation5 + $0x3c] sm:$0xf]
        %v307 = vld [vmem:[%s4] sm:$0x1]
        %v309 = vlaneseq
        %v310 = vshrl.u32 %v309, 7
        %v311 = vsub.s32 0, %v310
        %v312 = vrot.slane %v307, %v311
        %v330 = vunpack.c.l.b16 %v291
        %v331 = vunpack.c.l.b16 %v292
        %v332 = vunpack.c.l.b16 %v293
        %v333 = vunpack.c.l.b16 %v294
        %v334 = vunpack.c.l.b16 %v295
        %v335 = vunpack.c.l.b16 %v296
        %v336 = vunpack.c.l.b16 %v297
        %v337 = vunpack.c.l.b16 %v298
        %v338 = vunpack.c.l.b16 %v299
        %v339 = vunpack.c.l.b16 %v300
        %v340 = vunpack.c.l.b16 %v301
        %v341 = vunpack.c.l.b16 %v302
        %v342 = vunpack.c.l.b16 %v303
        %v343 = vunpack.c.l.b16 %v304
        %v344 = vunpack.c.l.b16 %v305
        %v345 = vunpack.c.l.b16 %v306
        %v346 = vpack.c.b16 %v331, %v330
        %v347 = vpack.c.b16 %v333, %v332
        %v348 = vpack.c.b16 %v335, %v334
        %v349 = vpack.c.b16 %v337, %v336
        %v350 = vpack.c.b16 %v339, %v338
        %v351 = vpack.c.b16 %v341, %v340
        %v352 = vpack.c.b16 %v343, %v342
        %v353 = vpack.c.b16 %v345, %v344
        %362 = vmatprep.subr.bf16.mxu0 0
        %363 = vmatpush1.bf16.msra.mxu0 %v353
        %364 = vmatprep.subr.bf16.mxu0 0
        %365 = vmatpush1.bf16.msra.mxu0 %v352
        %366 = vmatprep.subr.bf16.mxu0 0
        %367 = vmatpush1.bf16.msra.mxu0 %v351
        %368 = vmatprep.subr.bf16.mxu0 0
        %369 = vmatpush1.bf16.msra.mxu0 %v350
        %370 = vmatprep.subr.bf16.mxu0 0
        %371 = vmatpush1.bf16.msra.mxu0 %v349
        %372 = vmatprep.subr.bf16.mxu0 0
        %373 = vmatpush1.bf16.msra.mxu0 %v348
        %374 = vmatprep.subr.bf16.mxu0 0
        %375 = vmatpush1.bf16.msra.mxu0 %v347
        %376 = vmatprep.subr.bf16.mxu0 0
        %377 = vmatpush1.bf16.msra.mxu0 %v346
        %378 = vmatprep.subr.bf16.mxu0 0
        %379 = vmatpush2.bf16.msra.mxu0 0
        %380 = vmatprep.subr.bf16.mxu0 0
        %381 = vmatpush2.bf16.msra.mxu0 0
        %382 = vmatprep.subr.bf16.mxu0 0
        %383 = vmatpush2.bf16.msra.mxu0 0
        %384 = vmatprep.subr.bf16.mxu0 0
        %385 = vmatpush2.bf16.msra.mxu0 0
        %386 = vmatprep.subr.bf16.mxu0 0
        %387 = vmatpush2.bf16.msra.mxu0 0
        %388 = vmatprep.subr.bf16.mxu0 0
        %389 = vmatpush2.bf16.msra.mxu0 0
        %390 = vmatprep.subr.bf16.mxu0 0
        %391 = vmatpush2.bf16.msra.mxu0 0
        %392 = vmatprep.subr.bf16.mxu0 0
        %393 = vmatpush2.bf16.msra.mxu0 0
        %394 = vmatprep.mubr.bf16.mxu0 0
        %395 = vmatmul.mubr.bf16.gmra.mxu0 %v290
        %v396 = vpop.f32.mrf.mxu0
        %v397 = vadd.f32 %v312, %v396
        %v398 = vpop.f32.mrf.mxu0
        %v399 = vpop.f32.mrf.mxu0
        %v400 = vpop.f32.mrf.mxu0
        %401 = vdwg.mxu0
        %402 = vst [vmem:[%s254] sm:$0xff] %v397
        %s403 = sand.u32 %s141, 1
        %s404 = scalar_lea.sflag [#allocation4], %s403
        %s405 = sand.u32 %s141, 1
        %s406 = smul.addr %s405, 8
        %s407 = scalar_lea.vmem [#allocation7], %s406
        // Predicated region
        $region49: #{tpu_custom_call.1} parent=39 // pred_check
          %p408 = pneg %p151
        $region50: #{tpu_custom_call.1} parent=39 // pred_check_branch
          %410 = sbr.rel (%p408) target = $region52
        $region51: #{tpu_custom_call.1} parent=39 // pred_region
          %s412 = ssub.s32 128, 128
          %413 = vsyncadd %s404, %s412
          %s414 = smul.addr %s23, 128
          %s415 = scalar_lea.hbm %s5, %s414
          %s417 = sshll.u32 %s407, 4
          %s418 = int_to_ptr.vmem [resolvable:$true] %s417
          %420 = dma.vmem_to_hbm [thread:$0]  %s418, 128, %s415, %s404
        $region52: #{tpu_custom_call.1} parent=39 // pred_fallthru
          _
      $region40: #{tpu_custom_call.1} parent=5 // pred_fallthru
        _
      %p421 = scmp.le.s32.totalorder 2, %s18
      // Predicated region
      $region53: #{tpu_custom_call.1} parent=5 // pred_check
        %p422 = pneg %p421
      $region54: #{tpu_custom_call.1} parent=5 // pred_check_branch
        %424 = sbr.rel (%p422) target = $region56
      $region55: #{tpu_custom_call.1} parent=5 // pred_region
        %s425 = ssub.s32 %s18, 2
        // Predicated region
        $region57: #{tpu_custom_call.1} parent=55 // pred_check
          %p426 = pneg %p157
        $region58: #{tpu_custom_call.1} parent=55 // pred_check_branch
          %428 = sbr.rel (%p426) target = $region60
        $region59: #{tpu_custom_call.1} parent=55 // pred_region
          %s429 = sand.u32 %s142, 1
          %s430 = scalar_lea.sflag [#allocation4], %s429
          %s431 = sand.u32 %s142, 1
          %s432 = smul.addr %s431, 8
          %s433 = scalar_lea.vmem [#allocation7], %s432
          %434 = dma.done %s430, 128
        $region60: #{tpu_custom_call.1} parent=55 // pred_fallthru
          _
      $region56: #{tpu_custom_call.1} parent=5 // pred_fallthru
        _
    $region6: #{tpu_custom_call.1} parent=1 // loop_footer
      %s22 = sadd.s32 1, %s18
    $region7: #{tpu_custom_call.1} parent=1 // loop_footer_branch
      %17 = sbr.rel target = $region3
    $region8: #{tpu_custom_call.1} parent=1 // loop_exit
      _
    %435 = vsyncpa [#allocation3], 1
    %s436 = scalar_lea.sflag [#allocation3], 1
    %437 = vsyncpa %s436, 1
    %438 = vsyncpa [#allocation6], 1
    %439 = vsyncpa [#allocation4], 1
    %s440 = scalar_lea.sflag [#allocation4], 1
    %441 = vsyncpa %s440, 1

</llo_original>
